<compile_context>
chip_gen: v5e
topology: v5e:2x2
jax: 0.10.0
libtpu: 0.0.40
codegen_flags: <defaults>
</compile_context>

<pallas_src>
import functools

import jax
import jax.numpy as jnp
from jax.experimental import pallas as pl
from jax.experimental.pallas import tpu as pltpu


def _mpjpe_kernel(pred_ref, gt_ref, vis_ref, out_ref, *, n_valid):
    """One lane-dense tile of joints.

    pred_ref, gt_ref : (D, tile)    native dtype, cast to f32 in-kernel
    vis_ref          : (1, tile)    native dtype, cast to f32 in-kernel
    out_ref          : (1, 1, tile) f32 partial-sum accumulator; same block for
                       every step of the reduction axis (resident in VMEM).
    n_valid          : static true joint count B*J (for tail masking).
    """
    p = pl.program_id(0)
    k = pl.program_id(1)

    @pl.when(k == 0)
    def _():
        out_ref[...] = jnp.zeros_like(out_ref)

    tile = pred_ref.shape[-1]
    # Intended (unclamped) lane-tile index.  The index_map clamps OOB tiles to
    # the last real tile (so the DMA stays in bounds); here we mask with the
    # *intended* index so those duplicate reads contribute exactly zero.
    blk = p * pl.num_programs(1) + k
    lane = jax.lax.broadcasted_iota(jnp.int32, (1, tile), 1)
    valid = (blk * tile + lane) < n_valid                     # (1, tile) bool

    d = pred_ref[...].astype(jnp.float32) - gt_ref[...].astype(jnp.float32)  # (D, tile)
    ss = jnp.sum(d * d, axis=0, keepdims=True)                # (1, tile): tiny sublane reduce
    # Mask BEFORE sqrt: garbage in partial tail blocks must not become NaN.
    dist = jnp.sqrt(jnp.where(valid, ss, 0.0))
    contrib = jnp.where(valid, dist * vis_ref[...].astype(jnp.float32), 0.0)
    out_ref[...] += contrib[None]                             # lane-dense accumulate


def _round_up(x, m):
    return (x + m - 1) // m * m


def _default_num_partials():
    # Shard the reduction across TensorCores only where there are 2 of them
    # (v7x).  On single-TC parts (v5e/v6e) a second partial is just a serial
    # outer loop + an extra accumulator, so keep it at 1.
    try:
        kind = jax.devices()[0].device_kind.lower()
        return 2 if "v7" in kind else 1
    except Exception:  # pragma: no cover
        return 1


@functools.partial(jax.jit, static_argnames=("tile_n", "num_partials"))
def _mpjpe_loss_impl(pose_3d_pred, pose_3d_gt, vis_flag, *, tile_n, num_partials):
    assert pose_3d_pred.shape == pose_3d_gt.shape and pose_3d_pred.ndim == 3
    B, J, D = pose_3d_pred.shape
    assert vis_flag.shape == (B, J)
    n = B * J  # true joint count -> mean divisor (tail masking never inflates it)

    # Lane-dense SoA layout: (D, B*J), native dtypes (casts happen in-kernel).
    pred = jnp.transpose(pose_3d_pred.reshape(n, D))          # (D, n)
    gt = jnp.transpose(pose_3d_gt.reshape(n, D))              # (D, n)
    vis = vis_flag.reshape(1, n)                              # (1, n)

    # Lane tiles must be multiples of 128; shrink the tile for small problems.
    tile = _round_up(min(tile_n, _round_up(n, 128)), 128)
    total_blocks = pl.cdiv(n, tile)                 # only the last block is ragged
    k_tiles = pl.cdiv(total_blocks, num_partials)   # reduction steps per partial

    def in_map(p, k):
        # Clamp so the DMA never targets a fully out-of-bounds block; the
        # in-kernel validity mask zeroes any clamped-duplicate contribution.
        return (0, jnp.minimum(p * k_tiles + k, total_blocks - 1))

    itemsize_pose = jnp.dtype(pose_3d_pred.dtype).itemsize
    itemsize_vis = jnp.dtype(vis_flag.dtype).itemsize
    cost = pl.CostEstimate(
        flops=9 * n,                 # D subs + D muls + (D-1) adds + 1 mask-mul per joint
        transcendentals=n,           # one sqrt per joint
        bytes_accessed=2 * D * n * itemsize_pose + n * itemsize_vis
        + num_partials * tile * 4,
    )

    partials = pl.pallas_call(
        functools.partial(_mpjpe_kernel, n_valid=n),
        out_shape=jax.ShapeDtypeStruct((num_partials, 1, tile), jnp.float32),
        grid_spec=pltpu.PrefetchScalarGridSpec(
            num_scalar_prefetch=0,
            grid=(num_partials, k_tiles),
            in_specs=[
                pl.BlockSpec((D, tile), in_map),
                pl.BlockSpec((D, tile), in_map),
                pl.BlockSpec((1, tile), in_map),
            ],
            out_specs=pl.BlockSpec((1, 1, tile), lambda p, k: (p, 0, 0)),
        ),
        compiler_params=pltpu.CompilerParams(
            dimension_semantics=("parallel", "arbitrary")),
        cost_estimate=cost,
    )(pred, gt, vis)

    # Final tiny collapse + multiply by the precomputed 1/(true B*J) in XLA.
    return jnp.sum(partials) * jnp.float32(1.0 / n)


def mpjpe_loss(pose_3d_pred, pose_3d_gt, vis_flag, *, tile_n=32768, num_partials=None):
    if num_partials is None:
        num_partials = _default_num_partials()
    return _mpjpe_loss_impl(
        pose_3d_pred, pose_3d_gt, vis_flag, tile_n=tile_n, num_partials=num_partials
    )


def _reference(pred, gt, vis):
    return jnp.mean(
        jnp.linalg.norm(pred.astype(jnp.float32) - gt.astype(jnp.float32), axis=-1)
        * vis.astype(jnp.float32)
    )


if __name__ == "__main__":
    key = jax.random.PRNGKey(0)
    k1, k2, k3, k4, k5, k6 = jax.random.split(key, 6)

    # ---- Primary small test (matches the module's expected shapes) ----
    B, J, D = 2, 16, 3  # batch, joints, xyz  -> n = 32 (ragged vs 128-lane tile)
    pose_3d_pred = jax.random.normal(k1, (B, J, D), dtype=jnp.float32)
    pose_3d_gt = jax.random.normal(k2, (B, J, D), dtype=jnp.float32)
    vis_flag = (jax.random.uniform(k3, (B, J)) > 0.3).astype(jnp.float32)

    loss = mpjpe_loss(pose_3d_pred, pose_3d_gt, vis_flag)
    jax.block_until_ready(loss)
    ref = _reference(pose_3d_pred, pose_3d_gt, vis_flag)
    assert jnp.allclose(loss, ref, rtol=1e-5, atol=1e-6), (loss, ref)

    # Native-dtype path: bf16 poses are cast to f32 inside the kernel.
    loss_bf16 = mpjpe_loss(
        pose_3d_pred.astype(jnp.bfloat16), pose_3d_gt.astype(jnp.bfloat16), vis_flag
    )
    jax.block_until_ready(loss_bf16)
    assert jnp.allclose(loss_bf16, ref, rtol=2e-2, atol=1e-2), (loss_bf16, ref)

    # ---- Secondary check: multi-tile grid, ragged tail, clamped duplicate
    # tiles and both "partials" exercised (still tiny / fast). ----
    B2, J2 = 4, 250  # n = 1000, tile_n=128 -> 8 real tiles, 3 partials -> clamping
    p2 = jax.random.normal(k4, (B2, J2, D), dtype=jnp.float32)
    g2 = jax.random.normal(k5, (B2, J2, D), dtype=jnp.float32)
    v2 = (jax.random.uniform(k6, (B2, J2)) > 0.5).astype(jnp.float32)
    loss2 = mpjpe_loss(p2, g2, v2, tile_n=128, num_partials=3)
    jax.block_until_ready(loss2)
    ref2 = _reference(p2, g2, v2)
    assert jnp.allclose(loss2, ref2, rtol=1e-5, atol=1e-6), (loss2, ref2)

    print("KERNEL_OK")
</pallas_src>

<mosaic_0001>
module attributes {stable_mosaic.version = 11 : i64} {
  func.func @_mpjpe_kernel(%arg0: i32, %arg1: i32, %arg2: memref<3x128xf32, #tpu.memory_space<vmem>>, %arg3: memref<3x128xf32, #tpu.memory_space<vmem>>, %arg4: memref<1x128xf32, #tpu.memory_space<vmem>>, %arg5: memref<1x1x128xf32, #tpu.memory_space<vmem>>) attributes {dimension_semantics = [#tpu.dimension_semantics<parallel>, #tpu.dimension_semantics<arbitrary>], iteration_bounds = array<i64: 1, 1>, scalar_prefetch = 0 : i64, scratch_operands = 0 : i64, tpu.core_type = #tpu.core_type<tc>, window_params = [{transform_indices = @transform_0, window_bounds = array<i64: 3, 128>}, {transform_indices = @transform_1, window_bounds = array<i64: 3, 128>}, {transform_indices = @transform_2, window_bounds = array<i64: 1, 128>}, {transform_indices = @transform_3, window_bounds = array<i64: 1, 1, 128>}]} {
    %c0_i32 = arith.constant 0 : i32
    %0 = arith.cmpi eq, %arg1, %c0_i32 : i32
    %1 = arith.extui %0 : i1 to i32
    %c0_i32_0 = arith.constant 0 : i32
    %2 = arith.cmpi ne, %1, %c0_i32_0 : i32
    scf.if %2 {
      %cst_14 = arith.constant 0.000000e+00 : f32
      %28 = vector.broadcast %cst_14 : f32 to vector<1x1x128xf32>
      %c0_15 = arith.constant 0 : index
      %c0_16 = arith.constant 0 : index
      %c0_17 = arith.constant 0 : index
      %29 = vector.load %arg5[%c0_15, %c0_16, %c0_17] : memref<1x1x128xf32, #tpu.memory_space<vmem>>, vector<1x1x128xf32>
      tpu.vector_store %arg5[%c0_15, %c0_16, %c0_17], %28 {strides = array<i32>} : memref<1x1x128xf32, #tpu.memory_space<vmem>>, vector<1x1x128xf32>,
    } else {
    }
    %c1_i32 = arith.constant 1 : i32
    %3 = arith.muli %arg0, %c1_i32 : i32
    %4 = arith.addi %3, %arg1 : i32
    %5 = tpu.iota {dimensions = array<i32: 1>} : vector<1x128xi32>
    %c128_i32 = arith.constant 128 : i32
    %6 = arith.muli %4, %c128_i32 : i32
    %7 = vector.broadcast %6 : i32 to vector<1x128xi32>
    %8 = arith.addi %7, %5 : vector<1x128xi32>
    %c32_i32 = arith.constant 32 : i32
    %9 = vector.broadcast %c32_i32 : i32 to vector<1x128xi32>
    %10 = arith.cmpi slt, %8, %9 : vector<1x128xi32>
    %c0 = arith.constant 0 : index
    %c0_1 = arith.constant 0 : index
    %11 = vector.load %arg2[%c0, %c0_1] : memref<3x128xf32, #tpu.memory_space<vmem>>, vector<3x128xf32>
    %c0_2 = arith.constant 0 : index
    %c0_3 = arith.constant 0 : index
    %12 = vector.load %arg3[%c0_2, %c0_3] : memref<3x128xf32, #tpu.memory_space<vmem>>, vector<3x128xf32>
    %13 = arith.subf %11, %12 : vector<3x128xf32>
    %14 = arith.mulf %13, %13 : vector<3x128xf32>
    %cst = arith.constant dense<0.000000e+00> : vector<128xf32>
    %15 = vector.multi_reduction <add>, %14, %cst [0] : vector<3x128xf32> to vector<128xf32>
    %16 = vector.shape_cast %15 : vector<128xf32> to vector<1x128xf32>
    %cst_4 = arith.constant 0.000000e+00 : f32
    %17 = vector.broadcast %cst_4 : f32 to vector<1x128xf32>
    %18 = arith.select %10, %16, %17 : vector<1x128xi1>, vector<1x128xf32>
    %19 = math.sqrt %18 : vector<1x128xf32>
    %c0_5 = arith.constant 0 : index
    %c0_6 = arith.constant 0 : index
    %20 = vector.load %arg4[%c0_5, %c0_6] : memref<1x128xf32, #tpu.memory_space<vmem>>, vector<1x128xf32>
    %21 = arith.mulf %19, %20 : vector<1x128xf32>
    %cst_7 = arith.constant 0.000000e+00 : f32
    %22 = vector.broadcast %cst_7 : f32 to vector<1x128xf32>
    %23 = arith.select %10, %21, %22 : vector<1x128xi1>, vector<1x128xf32>
    %c0_8 = arith.constant 0 : index
    %c0_9 = arith.constant 0 : index
    %c0_10 = arith.constant 0 : index
    %24 = vector.load %arg5[%c0_8, %c0_9, %c0_10] : memref<1x1x128xf32, #tpu.memory_space<vmem>>, vector<1x1x128xf32>
    %25 = vector.shape_cast %23 : vector<1x128xf32> to vector<1x1x128xf32>
    %26 = arith.addf %24, %25 : vector<1x1x128xf32>
    %c0_11 = arith.constant 0 : index
    %c0_12 = arith.constant 0 : index
    %c0_13 = arith.constant 0 : index
    %27 = vector.load %arg5[%c0_11, %c0_12, %c0_13] : memref<1x1x128xf32, #tpu.memory_space<vmem>>, vector<1x1x128xf32>
    tpu.vector_store %arg5[%c0_11, %c0_12, %c0_13], %26 {strides = array<i32>} : memref<1x1x128xf32, #tpu.memory_space<vmem>>, vector<1x1x128xf32>,
    return
  }
  func.func @transform_0(%arg0: i32, %arg1: i32) -> (i32, i32) {
    %c1_i32 = arith.constant 1 : i32
    %0 = arith.muli %arg0, %c1_i32 : i32
    %1 = arith.addi %0, %arg1 : i32
    %c0_i32 = arith.constant 0 : i32
    %2 = arith.minsi %1, %c0_i32 : i32
    %c0_i32_0 = arith.constant 0 : i32
    %c0_i32_1 = arith.constant 0 : i32
    return %c0_i32_0, %2 : i32, i32
  }
  func.func @transform_1(%arg0: i32, %arg1: i32) -> (i32, i32) {
    %c1_i32 = arith.constant 1 : i32
    %0 = arith.muli %arg0, %c1_i32 : i32
    %1 = arith.addi %0, %arg1 : i32
    %c0_i32 = arith.constant 0 : i32
    %2 = arith.minsi %1, %c0_i32 : i32
    %c0_i32_0 = arith.constant 0 : i32
    %c0_i32_1 = arith.constant 0 : i32
    return %c0_i32_0, %2 : i32, i32
  }
  func.func @transform_2(%arg0: i32, %arg1: i32) -> (i32, i32) {
    %c1_i32 = arith.constant 1 : i32
    %0 = arith.muli %arg0, %c1_i32 : i32
    %1 = arith.addi %0, %arg1 : i32
    %c0_i32 = arith.constant 0 : i32
    %2 = arith.minsi %1, %c0_i32 : i32
    %c0_i32_0 = arith.constant 0 : i32
    %c0_i32_1 = arith.constant 0 : i32
    return %c0_i32_0, %2 : i32, i32
  }
  func.func @transform_3(%arg0: i32, %arg1: i32) -> (i32, i32, i32) {
    %c0_i32 = arith.constant 0 : i32
    %c0_i32_0 = arith.constant 0 : i32
    %c0_i32_1 = arith.constant 0 : i32
    return %arg0, %c0_i32, %c0_i32_0 : i32, i32, i32
  }
}

</mosaic_0001>

<llo_original>
// kernel: _mpjpe_loss_impl.1
$region0: #{_mpjpe_loss_impl.1}
  #allocation0 [shape = 'u32[]', space=smem, size = 0x4, offset = 0x4, fixed_abs, tag = 'smem constant byte address 0x4 - core index']
  #allocation1 [shape = 'u32[72,128]{1,0:T(1,128)}', space=vmem, size = 0x9000, scoped, tag = 'internal scratch']
  %s0 = inlined_call_operand.vmem [shape: f32[3,32], index: 0, kind: input, shape index: {}]
  %s1 = inlined_call_operand.vmem [shape: f32[3,32], index: 1, kind: input, shape index: {}]
  %s2 = inlined_call_operand.vmem [shape: f32[1,32], index: 2, kind: input, shape index: {}]
  %s3 = inlined_call_operand.vmem [shape: f32[1,1,128], index: 3, kind: output, shape index: {}]
  %s4 = sld [smem:[#allocation0]]
  $region26: #{_mpjpe_loss_impl.1} parent=0
    _
  %s6 = ssub.s32 1, %s4
  %s7 = scalar_select 0, %s6, %s4
  // Predicated region
  $region2: #{_mpjpe_loss_impl.1} parent=0 // pred_check
    _
  $region3: #{_mpjpe_loss_impl.1} parent=0 // pred_check_branch
    %9 = sbr.rel (0) target = $region5
  $region4: #{_mpjpe_loss_impl.1} parent=0 // pred_region
    %s10 = sadd.s32 0, 0
    %p11 = scmp.lt.s32.totalorder %s10, 0
    %s12 = scalar_select %p11, %s10, 0
    %p13 = scmp.lt.s32.totalorder %s12, 0
    %s14 = scalar_select %p13, %s12, 0
    %s15 = smul.addr %s14, 4
    %s16 = scalar_lea.vmem %s0, %s15
    %s17 = sadd.s32 0, 0
    %p18 = scmp.lt.s32.totalorder %s17, 0
    %s19 = scalar_select %p18, %s17, 0
  $region5: #{_mpjpe_loss_impl.1} parent=0 // pred_fallthru
    _
  // Predicated region
  $region6: #{_mpjpe_loss_impl.1} parent=0 // pred_check
    _
  $region7: #{_mpjpe_loss_impl.1} parent=0 // pred_check_branch
    %21 = sbr.rel (0) target = $region9
  $region8: #{_mpjpe_loss_impl.1} parent=0 // pred_region
    %s22 = sadd.s32 0, 0
    %p23 = scmp.lt.s32.totalorder %s22, 0
    %s24 = scalar_select %p23, %s22, 0
    %p25 = scmp.lt.s32.totalorder %s24, 0
    %s26 = scalar_select %p25, %s24, 0
    %s27 = smul.addr %s26, 4
    %s28 = scalar_lea.vmem %s1, %s27
    %s29 = sadd.s32 0, 0
    %p30 = scmp.lt.s32.totalorder %s29, 0
    %s31 = scalar_select %p30, %s29, 0
  $region9: #{_mpjpe_loss_impl.1} parent=0 // pred_fallthru
    _
  // Predicated region
  $region10: #{_mpjpe_loss_impl.1} parent=0 // pred_check
    _
  $region11: #{_mpjpe_loss_impl.1} parent=0 // pred_check_branch
    %33 = sbr.rel (0) target = $region13
  $region12: #{_mpjpe_loss_impl.1} parent=0 // pred_region
    %s34 = sadd.s32 0, 0
    %p35 = scmp.lt.s32.totalorder %s34, 0
    %s36 = scalar_select %p35, %s34, 0
    %p37 = scmp.lt.s32.totalorder %s36, 0
    %s38 = scalar_select %p37, %s36, 0
    %s39 = scalar_lea.vmem %s2, %s38
    %s40 = sadd.s32 0, 0
    %p41 = scmp.lt.s32.totalorder %s40, 0
    %s42 = scalar_select %p41, %s40, 0
  $region13: #{_mpjpe_loss_impl.1} parent=0 // pred_fallthru
    _
  %s43 = sadd.s32 0, 0
  %p44 = scmp.lt.s32.totalorder %s43, 0
  %s45 = scalar_select %p44, %s43, 0
  %p46 = scmp.lt.s32.totalorder %s45, 0
  %s47 = scalar_select %p46, %s45, 0
  %s48 = smul.addr %s47, 4
  %s49 = scalar_lea.vmem %s0, %s48
  %s50 = sadd.s32 0, 0
  %p51 = scmp.lt.s32.totalorder %s50, 0
  %s52 = scalar_select %p51, %s50, 0
  %p53 = scmp.lt.s32.totalorder %s52, 0
  %s54 = scalar_select %p53, %s52, 0
  %s55 = smul.addr %s54, 4
  %s56 = scalar_lea.vmem %s1, %s55
  %s57 = sadd.s32 0, 0
  %p58 = scmp.lt.s32.totalorder %s57, 0
  %s59 = scalar_select %p58, %s57, 0
  %p60 = scmp.lt.s32.totalorder %s59, 0
  %s61 = scalar_select %p60, %s59, 0
  %s62 = scalar_lea.vmem %s2, %s61
  %s63 = sadd.s32 0, 0
  %p64 = scmp.lt.s32.totalorder %s63, 0
  %s65 = scalar_select %p64, %s63, 0
  %p66 = scmp.lt.s32.totalorder %s65, 0
  %s67 = scalar_select %p66, %s65, 0
  %s68 = smul.addr %s67, 4
  %s69 = scalar_lea.vmem %s0, %s68
  %s70 = sadd.s32 0, 0
  %p71 = scmp.lt.s32.totalorder %s70, 0
  %s72 = scalar_select %p71, %s70, 0
  %s73 = sadd.s32 0, 0
  %p74 = scmp.lt.s32.totalorder %s73, 0
  %s75 = scalar_select %p74, %s73, 0
  %p76 = scmp.lt.s32.totalorder %s75, 0
  %s77 = scalar_select %p76, %s75, 0
  %s78 = smul.addr %s77, 4
  %s79 = scalar_lea.vmem %s1, %s78
  %s80 = sadd.s32 0, 0
  %p81 = scmp.lt.s32.totalorder %s80, 0
  %s82 = scalar_select %p81, %s80, 0
  %s83 = sadd.s32 0, 0
  %p84 = scmp.lt.s32.totalorder %s83, 0
  %s85 = scalar_select %p84, %s83, 0
  %p86 = scmp.lt.s32.totalorder %s85, 0
  %s87 = scalar_select %p86, %s85, 0
  %s88 = scalar_lea.vmem %s2, %s87
  %s89 = sadd.s32 0, 0
  %p90 = scmp.lt.s32.totalorder %s89, 0
  %s91 = scalar_select %p90, %s89, 0
  %p92 = scmp.eq.s32.totalorder 0, 0
  // Predicated region
  $region14: #{_mpjpe_loss_impl.1} parent=0 // pred_check
    %p93 = pneg %p92
  $region15: #{_mpjpe_loss_impl.1} parent=0 // pred_check_branch
    %95 = sbr.rel (%p93) target = $region17
  $region16: #{_mpjpe_loss_impl.1} parent=0 // pred_region
    %96 = vst [vmem:[%s3] sm:$0x1] 0.0
  $region17: #{_mpjpe_loss_impl.1} parent=0 // pred_fallthru
    _
  %s97 = sadd.s32 0, 0
  %v98 = vlaneseq
  %v99 = vand.u32 %v98, 127
  %s100 = smul.u32 %s97, 128
  %v101 = vstv %s100
  %v102 = vadd.s32 %v101, %v99
  %vm103 = vcmp.lt.s32.totalorder %v102, 32
  %v104 = vld [vmem:[%s69] sm:$0x7]
  %v105 = vld [vmem:[%s79] sm:$0x7]
  %v106 = vsub.f32 %v104, %v105
  %v107 = vmul.f32 %v106, %v106
  %vm108 = vcmask 1042432
  %v109 = vsel %vm108, %v107, 0.0
  %v110 = vrot.slane %v109, 4
  %v111 = vadd.f32 %v109, %v110
  %v112 = vrot.slane %v111, 2
  %v113 = vadd.f32 %v111, %v112
  %v114 = vrot.slane %v113, 1
  %v115 = vadd.f32 %v113, %v114
  %v116 = vsel %vm103, %v115, 0.0
  %v117 = vrsqrt.pop %v116
  %v118 = vmul.f32 %v117, %v116
  %v119 = vmul.f32 %v118, %v117
  %v120 = vmul.f32 0.5, %v119
  %v121 = vsub.f32 1.5, %v120
  %v122 = vmul.f32 %v117, %v121
  %v123 = vmul.f32 %v116, %v122
  %vm124 = vcmp.eq.f32.partialorder %v116, inf
  %v125 = vsel %vm124, %v116, %v123
  %vm126 = vcmp.eq.f32.partialorder %v116, 0.0
  %v127 = vand.u32 %v116, 2147483648
  %v128 = vsel %vm126, %v127, %v125
  %v129 = vld [vmem:[%s88] sm:$0x1]
  %v130 = vmul.f32 %v128, %v129
  %v131 = vsel %vm103, %v130, 0.0
  %v132 = vld [vmem:[%s3] sm:$0x1]
  %v133 = vadd.f32 %v132, %v131
  %134 = vst [vmem:[%s3] sm:$0x1] %v133
  // Predicated region
  $region18: #{_mpjpe_loss_impl.1} parent=0 // pred_check
    _
  $region19: #{_mpjpe_loss_impl.1} parent=0 // pred_check_branch
    %136 = sbr.rel (0) target = $region21
  $region20: #{_mpjpe_loss_impl.1} parent=0 // pred_region
    _
  $region21: #{_mpjpe_loss_impl.1} parent=0 // pred_fallthru
    _
  // Predicated region
  $region22: #{_mpjpe_loss_impl.1} parent=0 // pred_check
    _
  $region23: #{_mpjpe_loss_impl.1} parent=0 // pred_check_branch
    %138 = sbr.rel (0) target = $region25
  $region24: #{_mpjpe_loss_impl.1} parent=0 // pred_region
    _
  $region25: #{_mpjpe_loss_impl.1} parent=0 // pred_fallthru
    _

</llo_original>
